<compile_context>
chip_gen: v5e
topology: v5e:2x2
jax: 0.10.0
libtpu: 0.0.40
codegen_flags: <defaults>
</compile_context>

<pallas_src>
import jax
import jax.numpy as jnp
from jax.experimental import pallas as pl
from jax.experimental.pallas import tpu as pltpu

MINVAL = 1e-4
MAXVAL = 1e4
# PyTorch F.softplus default threshold: for x > 20, softplus(x) == x.
SOFTPLUS_THRESHOLD = 20.0

_LANE = 128
_TARGET_BLOCK_BYTES = 8 * 1024 * 1024   # in+out double-buffered -> 32 MiB peak
_VMEM_LIMIT_BYTES = 48 * 1024 * 1024    # headroom under v7x's 64 MiB physical VMEM


def _softplus_clip(x):
    # Threshold-guarded softplus (matches PyTorch numerics) + clamp.
    # Kept in the input dtype (bf16 stays bf16): matches the dtype-following
    # PyTorch module and keeps EUP pressure minimal on v7x.  log1p is kept
    # (not log(1+e^x)) for precision near the MINVAL clamp.
    sp = jnp.where(
        x > SOFTPLUS_THRESHOLD,
        x,
        jnp.log1p(jnp.exp(jnp.minimum(x, SOFTPLUS_THRESHOLD))),
    )
    return jnp.clip(sp, MINVAL, MAXVAL)


def _dispact_kernel(x_ref, o_ref):
    o_ref[...] = _softplus_clip(x_ref[...])


def dispact(x, *, donate=False):
    """Apply DispAct elementwise. x: any-shaped float array (e.g. NCHW).

    donate=True aliases the kernel output onto the input buffer
    (input_output_aliases={0: 0}); only useful if the caller actually donates
    x, otherwise XLA inserts a protective copy, so it defaults to False.
    """
    orig_shape = x.shape
    dtype = x.dtype
    flat = x.reshape(-1)
    n = flat.shape[0]

    itemsize = jnp.dtype(dtype).itemsize
    # dtype-aware sublane packing: f32 -> 8, bf16/f16 -> 16, int8/fp8 -> 32
    sub = {4: 8, 2: 16, 1: 32}.get(itemsize, 8)

    n_main = (n // _LANE) * _LANE
    if n_main == 0:
        # Less than one lane-dense row; a kernel launch is not worth it.
        return _softplus_clip(x)

    # Widen the lane (last) dim as far as it cleanly divides while keeping at
    # least `sub` rows (good vreg/sublane packing + wide unmasked stores).
    width = _LANE
    for w in (1024, 512, 256):
        if n_main % w == 0 and (n_main // w) >= sub:
            width = w
            break
    rows = n_main // width

    # Large (~8 MiB) blocks amortize the fixed ~0.35 us per-grid-step cost ...
    rows_per_block = max(sub, (_TARGET_BLOCK_BYTES // (width * itemsize)) // sub * sub)
    # ... but keep enough grid steps (>= 4, ideally ~8) so that after the
    # "parallel" axis is sharded across v7x's two TensorCores each core still
    # has >= 2 blocks and can overlap DMA with compute.  Harmless on v5e/v6e.
    for target_steps in (8, 4, 2):
        if rows >= target_steps * sub:
            step_cap = (rows // target_steps) // sub * sub
            rows_per_block = min(rows_per_block, max(sub, step_cap))
            break
    rows_per_block = min(rows_per_block, rows)

    grid = (pl.cdiv(rows, rows_per_block),)
    divisible = (n_main == n)

    # Zero-copy when n % 128 == 0; otherwise slice off the main part and allow
    # XLA to fuse that slice into the kernel's input DMA instead of
    # materializing an n_main-sized copy in HBM.
    slab = (flat if divisible else flat[:n_main]).reshape(rows, width)

    compiler_params = pltpu.CompilerParams(
        dimension_semantics=("parallel",),
        vmem_limit_bytes=_VMEM_LIMIT_BYTES,
        allow_input_fusion=None if divisible else [True],
    )

    out_main = pl.pallas_call(
        _dispact_kernel,
        out_shape=jax.ShapeDtypeStruct((rows, width), dtype),
        grid=grid,
        in_specs=[pl.BlockSpec((rows_per_block, width), lambda i: (i, 0))],
        out_specs=pl.BlockSpec((rows_per_block, width), lambda i: (i, 0)),
        compiler_params=compiler_params,
        input_output_aliases=({0: 0} if (donate and divisible) else {}),
    )(slab)

    if divisible:
        return out_main.reshape(orig_shape)

    # <128-element remainder: tiny, handled in plain jnp (single fused op).
    tail = _softplus_clip(flat[n_main:])
    return jnp.concatenate([out_main.reshape(-1), tail]).reshape(orig_shape)


if __name__ == "__main__":
    key = jax.random.PRNGKey(0)

    def ref(v):
        sp = jnp.where(
            v > SOFTPLUS_THRESHOLD,
            v,
            jnp.log1p(jnp.exp(jnp.minimum(v, SOFTPLUS_THRESHOLD))),
        )
        return jnp.clip(sp, MINVAL, MAXVAL)

    k0, k1 = jax.random.split(key)

    # NCHW input consistent with typical use of DispAct on conv feature maps.
    x = jax.random.normal(k0, (2, 4, 16, 16), dtype=jnp.float32) * 5.0
    y = dispact(x)
    jax.block_until_ready(y)
    assert y.shape == x.shape and y.dtype == x.dtype
    assert jnp.allclose(y, ref(x), atol=1e-6, rtol=1e-6), "mismatch (divisible path)"

    # Also exercise the non-128-divisible tail path once.
    x2 = jax.random.normal(k1, (3, 5, 7, 11), dtype=jnp.float32) * 5.0
    y2 = dispact(x2)
    jax.block_until_ready(y2)
    assert y2.shape == x2.shape and y2.dtype == x2.dtype
    assert jnp.allclose(y2, ref(x2), atol=1e-6, rtol=1e-6), "mismatch (tail path)"

    print("KERNEL_OK")
</pallas_src>

<mosaic_0001>
module attributes {stable_mosaic.version = 11 : i64} {
  func.func @_dispact_kernel(%arg0: i32, %arg1: memref<8x256xf32, #tpu.memory_space<vmem>>, %arg2: memref<8x256xf32, #tpu.memory_space<vmem>>) attributes {dimension_semantics = [#tpu.dimension_semantics<parallel>], iteration_bounds = array<i64: 1>, scalar_prefetch = 0 : i64, scratch_operands = 0 : i64, tpu.core_type = #tpu.core_type<tc>, window_params = [{transform_indices = @transform_0, window_bounds = array<i64: 8, 256>}, {transform_indices = @transform_1, window_bounds = array<i64: 8, 256>}]} {
    %c0 = arith.constant 0 : index
    %c0_0 = arith.constant 0 : index
    %0 = vector.load %arg1[%c0, %c0_0] : memref<8x256xf32, #tpu.memory_space<vmem>>, vector<8x256xf32>
    %cst = arith.constant 2.000000e+01 : f32
    %1 = vector.broadcast %cst : f32 to vector<8x256xf32>
    %2 = arith.cmpf ogt, %0, %1 : vector<8x256xf32>
    %cst_1 = arith.constant 2.000000e+01 : f32
    %3 = vector.broadcast %cst_1 : f32 to vector<8x256xf32>
    %4 = arith.minimumf %0, %3 : vector<8x256xf32>
    %5 = math.exp %4 : vector<8x256xf32>
    %6 = math.log1p %5 : vector<8x256xf32>
    %7 = arith.select %2, %0, %6 : vector<8x256xi1>, vector<8x256xf32>
    %cst_2 = arith.constant 9.99999974E-5 : f32
    %cst_3 = arith.constant 1.000000e+04 : f32
    %8 = vector.broadcast %cst_2 : f32 to vector<8x256xf32>
    %9 = arith.maximumf %8, %7 : vector<8x256xf32>
    %10 = vector.broadcast %cst_3 : f32 to vector<8x256xf32>
    %11 = arith.minimumf %10, %9 : vector<8x256xf32>
    %c0_4 = arith.constant 0 : index
    %c0_5 = arith.constant 0 : index
    %12 = vector.load %arg2[%c0_4, %c0_5] : memref<8x256xf32, #tpu.memory_space<vmem>>, vector<8x256xf32>
    tpu.vector_store %arg2[%c0_4, %c0_5], %11 {strides = array<i32>} : memref<8x256xf32, #tpu.memory_space<vmem>>, vector<8x256xf32>,
    return
  }
  func.func @transform_0(%arg0: i32) -> (i32, i32) {
    %c0_i32 = arith.constant 0 : i32
    %c0_i32_0 = arith.constant 0 : i32
    return %arg0, %c0_i32 : i32, i32
  }
  func.func @transform_1(%arg0: i32) -> (i32, i32) {
    %c0_i32 = arith.constant 0 : i32
    %c0_i32_0 = arith.constant 0 : i32
    return %arg0, %c0_i32 : i32, i32
  }
}

</mosaic_0001>

<llo_original>
// kernel: tpu_custom_call.1
$region0: #{tpu_custom_call.1}
  #allocation0 [shape = 'u32[]', space=smem, size = 0x4, offset = 0x4, fixed_abs, tag = 'smem constant byte address 0x4 - core index']
  #allocation1 [shape = 'u32[72,128]{1,0:T(1,128)}', space=vmem, size = 0x9000, scoped, tag = 'internal scratch']
  %s0 = inlined_call_operand.hbm [shape: f32[8,256], index: 0, kind: input, shape index: {}]
  %s1 = inlined_call_operand.hbm [shape: f32[8,256], index: 1, kind: output, shape index: {}]
  %s2 = sld [smem:[#allocation0]]
  $region18: #{tpu_custom_call.1} parent=0
    _
  %s4 = ssub.s32 1, %s2
  %s5 = scalar_select 0, %s4, %s2
  $region1: #{tpu_custom_call.1} parent=0
    #allocation2 [shape = 'u8[8192]{0}', space=vmem, size = 0x2000, scoped, tag = 'input window, operand 0, single buffered']
    #allocation3 [shape = 's32[1]{0}', space=sflag, size = 0x4, scoped, tag = 'scoped memory for tpu_custom_call.1']
    #allocation4 [shape = 's32[1]{0}', space=sflag, size = 0x4, scoped, tag = 'scoped memory for tpu_custom_call.1']
    #allocation5 [shape = 'u8[8192]{0}', space=vmem, size = 0x2000, scoped, tag = 'output window, operand 0, single buffered']
    %6 = vsyncpa [#allocation3], 0
    %7 = vsyncpa [#allocation4], 0
    // Predicated region
    $region2: #{tpu_custom_call.1} parent=1 // pred_check
      _
    $region3: #{tpu_custom_call.1} parent=1 // pred_check_branch
      %9 = sbr.rel (0) target = $region5
    $region4: #{tpu_custom_call.1} parent=1 // pred_region
      %11 = vsyncadd [#allocation3], 0
      %s13 = sshll.u32 %s0, 4
      %s14 = int_to_ptr.hbm [resolvable:$true] %s13
      %s15 = sshll.u32 [#allocation2], 4
      %s16 = int_to_ptr.vmem [resolvable:$true] %s15
      %18 = dma.hbm_to_vmem [thread:$0]  %s14, 256, %s16, [#allocation3]
    $region5: #{tpu_custom_call.1} parent=1 // pred_fallthru
      _
    // Predicated region
    $region6: #{tpu_custom_call.1} parent=1 // pred_check
      _
    $region7: #{tpu_custom_call.1} parent=1 // pred_check_branch
      %20 = sbr.rel (0) target = $region9
    $region8: #{tpu_custom_call.1} parent=1 // pred_region
      %22 = dma.done [#allocation3], 256
    $region9: #{tpu_custom_call.1} parent=1 // pred_fallthru
      _
    %v23 = vld [vmem:[#allocation2] sm:$0xff]
    %v24 = vld [vmem:[#allocation2 + $0x8] sm:$0xff]
    %vm25 = vcmp.gt.f32.partialorder %v23, 20.0
    %vm26 = vcmp.gt.f32.partialorder %v24, 20.0
    %v27 = vmin.f32 %v23, 20.0
    %v28 = vmin.f32 %v24, 20.0
    %v29 = vmul.f32 %v27, 1.442695
    %v30 = vpow.pop %v29
    %v31 = vmul.f32 %v28, 1.442695
    %v32 = vpow.pop %v31
    %v33 = vadd.f32 %v30, 1.0
    %v34 = vlog2.pop %v33
    %v35 = vmul.f32 %v34, 0.6931472
    %v36 = vmul.f32 -0.5, %v30
    %v37 = vadd.f32 %v36, 1.0
    %v38 = vmul.f32 %v37, %v30
    %v39 = vand.u32 2147483647, %v30
    %vm40 = vcmp.lt.f32.partialorder %v39, 0.0004427343
    %v41 = vsel %vm40, %v38, %v35
    %v42 = vadd.f32 %v32, 1.0
    %v43 = vlog2.pop %v42
    %v44 = vmul.f32 %v43, 0.6931472
    %v45 = vmul.f32 -0.5, %v32
    %v46 = vadd.f32 %v45, 1.0
    %v47 = vmul.f32 %v46, %v32
    %v48 = vand.u32 2147483647, %v32
    %vm49 = vcmp.lt.f32.partialorder %v48, 0.0004427343
    %v50 = vsel %vm49, %v47, %v44
    %v51 = vsel %vm25, %v23, %v41
    %v52 = vsel %vm26, %v24, %v50
    %v53 = vmax.f32 %v51, 0.0001
    %v54 = vmax.f32 %v52, 0.0001
    %v55 = vmin.f32 %v53, 10000.0
    %v56 = vmin.f32 %v54, 10000.0
    %57 = vst [vmem:[#allocation5] sm:$0xff] %v55
    %58 = vst [vmem:[#allocation5 + $0x8] sm:$0xff] %v56
    // Predicated region
    $region10: #{tpu_custom_call.1} parent=1 // pred_check
      _
    $region11: #{tpu_custom_call.1} parent=1 // pred_check_branch
      %60 = sbr.rel (0) target = $region13
    $region12: #{tpu_custom_call.1} parent=1 // pred_region
      %62 = vsyncadd [#allocation4], 0
      %s64 = sshll.u32 [#allocation5], 4
      %s65 = int_to_ptr.vmem [resolvable:$true] %s64
      %s66 = sshll.u32 %s1, 4
      %s67 = int_to_ptr.hbm [resolvable:$true] %s66
      %69 = dma.vmem_to_hbm [thread:$0]  %s65, 256, %s67, [#allocation4]
    $region13: #{tpu_custom_call.1} parent=1 // pred_fallthru
      _
    // Predicated region
    $region14: #{tpu_custom_call.1} parent=1 // pred_check
      _
    $region15: #{tpu_custom_call.1} parent=1 // pred_check_branch
      %71 = sbr.rel (0) target = $region17
    $region16: #{tpu_custom_call.1} parent=1 // pred_region
      %73 = dma.done [#allocation4], 256
    $region17: #{tpu_custom_call.1} parent=1 // pred_fallthru
      _
    %74 = vsyncpa [#allocation3], 1
    %75 = vsyncpa [#allocation4], 1

</llo_original>
